<compile_context>
chip_gen: v5e
topology: v5e:2x2
jax: 0.10.0
libtpu: 0.0.40
codegen_flags: <defaults>
</compile_context>

<pallas_src>
import jax
import jax.numpy as jnp
from jax import lax
from jax.experimental import pallas as pl
from jax.experimental.pallas import tpu as pltpu

N_STATES = 4          # CartPole-v0 observation dim
N_ACTIONS = 2         # CartPole-v0 action dim
HIDDEN = 256
H2 = 2 * HIDDEN       # fused actor+critic hidden width
K_PAD = 8             # states padded to 8 sublanes (zero rows contribute nothing)
OUT_ROWS = 8          # output sublanes: [p0, p1, value, logit0, logit1, 0, 0, 0]
BLOCK_B_MAX = 1024    # max batch rows per grid step (VMEM headroom even on v7x)

assert N_ACTIONS == 2, "kernel uses the 2-action closed-form softmax (sigmoid)"


def _round_up(a, m):
    return ((a + m - 1) // m) * m


def choose_block_b(batch):
    """Largest 128-multiple block <= 1024, keeping >= 2 grid steps when possible
    so the parallel batch axis can be sharded across v7x's 2 TensorCores."""
    if batch <= 128:
        return 128
    half = _round_up((batch + 1) // 2, 128)
    return min(BLOCK_B_MAX, half)


def actor_critic_kernel(xt_ref, w1t_ref, b1_ref, w2t_ref, b2_ref, out_ref):
    # xt_ref : [K_PAD, B_blk]  f32  — states on sublanes (rows 0:N_STATES), batch on lanes
    # w1t_ref: [H2, K_PAD]     bf16 — fused actor|critic layer-1 weights, transposed
    # b1_ref : [H2, 1]         f32  — fused layer-1 biases
    # w2t_ref: [OUT_ROWS, H2]  bf16 — fused layer-2 weights, transposed, padded to 8 rows
    # b2_ref : [OUT_ROWS, 1]   f32  — fused layer-2 biases
    # out_ref: [OUT_ROWS, B_blk] f32 — rows: p0, p1, value, logit0, logit1, zeros
    xt = xt_ref[...].astype(jnp.bfloat16)

    # Fused layer 1: one MXU push, f32 bias add + ReLU on the VPU.
    ht = jnp.dot(w1t_ref[...], xt, preferred_element_type=jnp.float32)   # [512, B]
    ht = jnp.maximum(ht + b1_ref[...], 0.0)

    # Fused layer 2: one MXU push -> rows 0:2 actor logits, row 2 critic value.
    zt = jnp.dot(w2t_ref[...], ht.astype(jnp.bfloat16),
                 preferred_element_type=jnp.float32) + b2_ref[...]       # [8, B]

    l0 = zt[0:1, :]
    l1 = zt[1:2, :]
    val = zt[2:3, :]

    # Exact 2-action softmax: p1 = sigmoid(l1 - l0), p0 = 1 - p1 (sums to exactly 1).
    p1 = 1.0 / (1.0 + jnp.exp(l0 - l1))
    p0 = 1.0 - p1

    # Single unmasked lane-dense store of the packed [8, B_blk] slab.
    row = lax.broadcasted_iota(jnp.int32, out_ref.shape, 0)
    out_ref[...] = jnp.where(row == 0, p0,
                   jnp.where(row == 1, p1,
                   jnp.where(row == 2, val,
                   jnp.where(row == 3, l0,
                   jnp.where(row == 4, l1, 0.0)))))


def fuse_params(p):
    """Fuse the 8 PyTorch-style tensors into 4 kernel tensors (done once)."""
    # Layer 1: actor|critic weights fused along the output dim, stored transposed
    # [H2, K_PAD] bf16 (zero columns for the padded state rows). Biases stay f32.
    w1 = jnp.concatenate([p["w1a"], p["w1c"]], axis=1)                    # [4, 512]
    w1t = jnp.zeros((H2, K_PAD), jnp.float32).at[:, :N_STATES].set(w1.T)
    w1t = w1t.astype(jnp.bfloat16)                                        # [512, 8]
    b1 = jnp.concatenate([p["b1a"], p["b1c"]], axis=1).T                  # [512, 1] f32

    # Layer 2: block structure, transposed, padded to OUT_ROWS sublanes.
    w2t = jnp.zeros((OUT_ROWS, H2), jnp.float32)
    w2t = w2t.at[:N_ACTIONS, :HIDDEN].set(p["w2a"].T)                     # actor rows
    w2t = w2t.at[N_ACTIONS, HIDDEN:].set(p["w2c"][:, 0])                  # critic row
    w2t = w2t.astype(jnp.bfloat16)                                        # [8, 512]

    b2 = jnp.zeros((OUT_ROWS, 1), jnp.float32)
    b2 = b2.at[:N_ACTIONS, 0].set(p["b2a"][0])
    b2 = b2.at[N_ACTIONS, 0].set(p["b2c"][0, 0])                          # [8, 1]
    return w1t, b1, w2t, b2


def actor_critic_forward(x, fused, *, block_b=None, return_logits=False):
    """x: [B, N_STATES] f32. Returns (probs [B, N_ACTIONS], value [B, 1]) f32,
    plus raw logits [B, N_ACTIONS] if return_logits=True."""
    w1t, b1, w2t, b2 = fused
    B = x.shape[0]
    blk = block_b if block_b is not None else choose_block_b(B)
    Bp = _round_up(B, blk)

    # Transposed, sublane-padded input: states on sublanes, batch on lanes.
    xt = jnp.pad(x.T, ((0, K_PAD - N_STATES), (0, Bp - B)))               # [8, Bp]

    out = pl.pallas_call(
        actor_critic_kernel,
        out_shape=jax.ShapeDtypeStruct((OUT_ROWS, Bp), jnp.float32),
        grid=(Bp // blk,),
        in_specs=[
            pl.BlockSpec((K_PAD, blk), lambda i: (0, i)),       # x^T: tiled over batch
            pl.BlockSpec((H2, K_PAD), lambda i: (0, 0)),        # w1^T: resident
            pl.BlockSpec((H2, 1), lambda i: (0, 0)),            # b1:   resident
            pl.BlockSpec((OUT_ROWS, H2), lambda i: (0, 0)),     # w2^T: resident
            pl.BlockSpec((OUT_ROWS, 1), lambda i: (0, 0)),      # b2:   resident
        ],
        out_specs=pl.BlockSpec((OUT_ROWS, blk), lambda i: (0, i)),
        compiler_params=pltpu.CompilerParams(
            dimension_semantics=("parallel",)),
    )(xt, w1t, b1, w2t, b2)

    probs = out[:N_ACTIONS, :B].T                                         # [B, 2]
    value = out[N_ACTIONS, :B][:, None]                                   # [B, 1]
    if return_logits:
        logits = out[N_ACTIONS + 1:2 * N_ACTIONS + 1, :B].T               # [B, 2]
        return probs, value, logits
    return probs, value


def init_params(key):
    """nn.Linear-style init (uniform +/- 1/sqrt(fan_in)); weights stored as [in, out]."""
    ks = jax.random.split(key, 8)

    def linear(kw, kb, fan_in, fan_out):
        bound = 1.0 / jnp.sqrt(float(fan_in))
        w = jax.random.uniform(kw, (fan_in, fan_out), jnp.float32, -bound, bound)
        b = jax.random.uniform(kb, (1, fan_out), jnp.float32, -bound, bound)
        return w, b

    w1a, b1a = linear(ks[0], ks[1], N_STATES, HIDDEN)
    w2a, b2a = linear(ks[2], ks[3], HIDDEN, N_ACTIONS)
    w1c, b1c = linear(ks[4], ks[5], N_STATES, HIDDEN)
    w2c, b2c = linear(ks[6], ks[7], HIDDEN, 1)
    return dict(w1a=w1a, b1a=b1a, w2a=w2a, b2a=b2a,
                w1c=w1c, b1c=b1c, w2c=w2c, b2c=b2c)


def reference_forward(x, p):
    """Pure-f32 JAX reference matching the PyTorch module exactly."""
    h_a = jnp.maximum(x @ p["w1a"] + p["b1a"], 0.0)
    logits = h_a @ p["w2a"] + p["b2a"]
    probs = jax.nn.softmax(logits, axis=-1)
    h_c = jnp.maximum(x @ p["w1c"] + p["b1c"], 0.0)
    value = h_c @ p["w2c"] + p["b2c"]
    return probs, value, logits


if __name__ == "__main__":
    key = jax.random.PRNGKey(0)
    k_params, k_x = jax.random.split(key)
    params = init_params(k_params)
    fused = fuse_params(params)

    # A realistic vectorized-env batch; exercises batch padding (200 -> 256) and a
    # 2-step grid (so both v7x TensorCores get a block).
    B = 200
    x = jax.random.normal(k_x, (B, N_STATES), dtype=jnp.float32)

    probs, value, logits = actor_critic_forward(x, fused, return_logits=True)
    jax.block_until_ready((probs, value, logits))

    # Correctness vs the pure-f32 reference (kernel uses bf16 MXU operands, so
    # tolerances are bf16-scale; biases/elementwise are f32).
    ref_probs, ref_value, ref_logits = reference_forward(x, params)
    assert probs.shape == (B, N_ACTIONS) and value.shape == (B, 1)
    assert bool(jnp.all(jnp.isfinite(probs))) and bool(jnp.all(jnp.isfinite(value)))
    assert jnp.allclose(probs, ref_probs, atol=1.5e-2), \
        float(jnp.max(jnp.abs(probs - ref_probs)))
    assert jnp.allclose(value, ref_value, atol=3e-2), \
        float(jnp.max(jnp.abs(value - ref_value)))
    assert jnp.allclose(logits, ref_logits, atol=3e-2), \
        float(jnp.max(jnp.abs(logits - ref_logits)))
    # Closed-form sigmoid softmax sums to 1 exactly (up to fp rounding).
    assert jnp.allclose(jnp.sum(probs, axis=-1), 1.0, atol=1e-5)

    # TODO(synk): torch.distributions.Categorical (sampling / log_prob) has no Pallas
    # equivalent here; the kernel returns the probs (and raw logits) that parameterize it.
    print("KERNEL_OK")
</pallas_src>

<mosaic_0001>
module attributes {stable_mosaic.version = 11 : i64} {
  func.func @actor_critic_kernel(%arg0: i32, %arg1: memref<8x128xf32, #tpu.memory_space<vmem>>, %arg2: memref<512x8xbf16, #tpu.memory_space<vmem>>, %arg3: memref<512x1xf32, #tpu.memory_space<vmem>>, %arg4: memref<8x512xbf16, #tpu.memory_space<vmem>>, %arg5: memref<8x1xf32, #tpu.memory_space<vmem>>, %arg6: memref<8x128xf32, #tpu.memory_space<vmem>>) attributes {dimension_semantics = [#tpu.dimension_semantics<parallel>], iteration_bounds = array<i64: 2>, scalar_prefetch = 0 : i64, scratch_operands = 0 : i64, tpu.core_type = #tpu.core_type<tc>, window_params = [{transform_indices = @transform_0, window_bounds = array<i64: 8, 128>}, {pipeline_mode = #tpu.pipeline_mode<synchronous>, transform_indices = @transform_1, window_bounds = array<i64: 512, 8>}, {pipeline_mode = #tpu.pipeline_mode<synchronous>, transform_indices = @transform_2, window_bounds = array<i64: 512, 1>}, {pipeline_mode = #tpu.pipeline_mode<synchronous>, transform_indices = @transform_3, window_bounds = array<i64: 8, 512>}, {pipeline_mode = #tpu.pipeline_mode<synchronous>, transform_indices = @transform_4, window_bounds = array<i64: 8, 1>}, {transform_indices = @transform_5, window_bounds = array<i64: 8, 128>}]} {
    %c0 = arith.constant 0 : index
    %c0_0 = arith.constant 0 : index
    %0 = vector.load %arg1[%c0, %c0_0] : memref<8x128xf32, #tpu.memory_space<vmem>>, vector<8x128xf32>
    %1 = arith.truncf %0 : vector<8x128xf32> to vector<8x128xbf16>
    %c0_1 = arith.constant 0 : index
    %c0_2 = arith.constant 0 : index
    %2 = vector.load %arg2[%c0_1, %c0_2] : memref<512x8xbf16, #tpu.memory_space<vmem>>, vector<512x8xbf16>
    %cst = arith.constant dense<0.000000e+00> : vector<512x128xf32>
    %3 = tpu.matmul %2, %1, %cst {dimension_numbers = #tpu.dot_dimension_numbers<[1], [0], [0], [1], [0, 0, 1, 1], [], []>} : vector<512x8xbf16>, vector<8x128xbf16>, vector<512x128xf32> -> vector<512x128xf32>
    %c0_3 = arith.constant 0 : index
    %c0_4 = arith.constant 0 : index
    %4 = vector.load %arg3[%c0_3, %c0_4] : memref<512x1xf32, #tpu.memory_space<vmem>>, vector<512x1xf32>
    %5 = vector.broadcast %4 : vector<512x1xf32> to vector<512x128xf32>
    %6 = arith.addf %3, %5 : vector<512x128xf32>
    %cst_5 = arith.constant 0.000000e+00 : f32
    %7 = vector.broadcast %cst_5 : f32 to vector<512x128xf32>
    %8 = arith.maximumf %6, %7 : vector<512x128xf32>
    %c0_6 = arith.constant 0 : index
    %c0_7 = arith.constant 0 : index
    %9 = vector.load %arg4[%c0_6, %c0_7] : memref<8x512xbf16, #tpu.memory_space<vmem>>, vector<8x512xbf16>
    %10 = arith.truncf %8 : vector<512x128xf32> to vector<512x128xbf16>
    %cst_8 = arith.constant dense<0.000000e+00> : vector<8x128xf32>
    %11 = tpu.matmul %9, %10, %cst_8 {dimension_numbers = #tpu.dot_dimension_numbers<[1], [0], [0], [1], [0, 0, 1, 1], [], []>} : vector<8x512xbf16>, vector<512x128xbf16>, vector<8x128xf32> -> vector<8x128xf32>
    %c0_9 = arith.constant 0 : index
    %c0_10 = arith.constant 0 : index
    %12 = vector.load %arg5[%c0_9, %c0_10] : memref<8x1xf32, #tpu.memory_space<vmem>>, vector<8x1xf32>
    %13 = vector.broadcast %12 : vector<8x1xf32> to vector<8x128xf32>
    %14 = arith.addf %11, %13 : vector<8x128xf32>
    %15 = vector.extract_strided_slice %14 {offsets = [0, 0], sizes = [1, 128], strides = [1, 1]} : vector<8x128xf32> to vector<1x128xf32>
    %16 = vector.extract_strided_slice %14 {offsets = [1, 0], sizes = [1, 128], strides = [1, 1]} : vector<8x128xf32> to vector<1x128xf32>
    %17 = vector.extract_strided_slice %14 {offsets = [2, 0], sizes = [1, 128], strides = [1, 1]} : vector<8x128xf32> to vector<1x128xf32>
    %18 = arith.subf %15, %16 : vector<1x128xf32>
    %19 = math.exp %18 : vector<1x128xf32>
    %cst_11 = arith.constant 1.000000e+00 : f32
    %20 = vector.broadcast %cst_11 : f32 to vector<1x128xf32>
    %21 = arith.addf %20, %19 : vector<1x128xf32>
    %cst_12 = arith.constant 1.000000e+00 : f32
    %22 = vector.broadcast %cst_12 : f32 to vector<1x128xf32>
    %23 = arith.divf %22, %21 : vector<1x128xf32>
    %cst_13 = arith.constant 1.000000e+00 : f32
    %24 = vector.broadcast %cst_13 : f32 to vector<1x128xf32>
    %25 = arith.subf %24, %23 : vector<1x128xf32>
    %26 = tpu.iota {dimensions = array<i32: 0>} : vector<8x128xi32>
    %c0_i32 = arith.constant 0 : i32
    %27 = vector.broadcast %c0_i32 : i32 to vector<8x128xi32>
    %28 = arith.cmpi eq, %26, %27 : vector<8x128xi32>
    %c1_i32 = arith.constant 1 : i32
    %29 = vector.broadcast %c1_i32 : i32 to vector<8x128xi32>
    %30 = arith.cmpi eq, %26, %29 : vector<8x128xi32>
    %c2_i32 = arith.constant 2 : i32
    %31 = vector.broadcast %c2_i32 : i32 to vector<8x128xi32>
    %32 = arith.cmpi eq, %26, %31 : vector<8x128xi32>
    %c3_i32 = arith.constant 3 : i32
    %33 = vector.broadcast %c3_i32 : i32 to vector<8x128xi32>
    %34 = arith.cmpi eq, %26, %33 : vector<8x128xi32>
    %c4_i32 = arith.constant 4 : i32
    %35 = vector.broadcast %c4_i32 : i32 to vector<8x128xi32>
    %36 = arith.cmpi eq, %26, %35 : vector<8x128xi32>
    %cst_14 = arith.constant 0.000000e+00 : f32
    %37 = vector.shape_cast %16 : vector<1x128xf32> to vector<1x128xf32>
    %38 = vector.broadcast %37 : vector<1x128xf32> to vector<8x128xf32>
    %39 = vector.broadcast %cst_14 : f32 to vector<8x128xf32>
    %40 = arith.select %36, %38, %39 : vector<8x128xi1>, vector<8x128xf32>
    %41 = vector.shape_cast %15 : vector<1x128xf32> to vector<1x128xf32>
    %42 = vector.broadcast %41 : vector<1x128xf32> to vector<8x128xf32>
    %43 = arith.select %34, %42, %40 : vector<8x128xi1>, vector<8x128xf32>
    %44 = vector.shape_cast %17 : vector<1x128xf32> to vector<1x128xf32>
    %45 = vector.broadcast %44 : vector<1x128xf32> to vector<8x128xf32>
    %46 = arith.select %32, %45, %43 : vector<8x128xi1>, vector<8x128xf32>
    %47 = vector.shape_cast %23 : vector<1x128xf32> to vector<1x128xf32>
    %48 = vector.broadcast %47 : vector<1x128xf32> to vector<8x128xf32>
    %49 = arith.select %30, %48, %46 : vector<8x128xi1>, vector<8x128xf32>
    %50 = vector.shape_cast %25 : vector<1x128xf32> to vector<1x128xf32>
    %51 = vector.broadcast %50 : vector<1x128xf32> to vector<8x128xf32>
    %52 = arith.select %28, %51, %49 : vector<8x128xi1>, vector<8x128xf32>
    %c0_15 = arith.constant 0 : index
    %c0_16 = arith.constant 0 : index
    %53 = vector.load %arg6[%c0_15, %c0_16] : memref<8x128xf32, #tpu.memory_space<vmem>>, vector<8x128xf32>
    tpu.vector_store %arg6[%c0_15, %c0_16], %52 {strides = array<i32>} : memref<8x128xf32, #tpu.memory_space<vmem>>, vector<8x128xf32>,
    return
  }
  func.func @transform_0(%arg0: i32) -> (i32, i32) {
    %c0_i32 = arith.constant 0 : i32
    %c0_i32_0 = arith.constant 0 : i32
    return %c0_i32, %arg0 : i32, i32
  }
  func.func @transform_1(%arg0: i32) -> (i32, i32) {
    %c0_i32 = arith.constant 0 : i32
    %c0_i32_0 = arith.constant 0 : i32
    %c0_i32_1 = arith.constant 0 : i32
    return %c0_i32, %c0_i32_0 : i32, i32
  }
  func.func @transform_2(%arg0: i32) -> (i32, i32) {
    %c0_i32 = arith.constant 0 : i32
    %c0_i32_0 = arith.constant 0 : i32
    %c0_i32_1 = arith.constant 0 : i32
    return %c0_i32, %c0_i32_0 : i32, i32
  }
  func.func @transform_3(%arg0: i32) -> (i32, i32) {
    %c0_i32 = arith.constant 0 : i32
    %c0_i32_0 = arith.constant 0 : i32
    %c0_i32_1 = arith.constant 0 : i32
    return %c0_i32, %c0_i32_0 : i32, i32
  }
  func.func @transform_4(%arg0: i32) -> (i32, i32) {
    %c0_i32 = arith.constant 0 : i32
    %c0_i32_0 = arith.constant 0 : i32
    %c0_i32_1 = arith.constant 0 : i32
    return %c0_i32, %c0_i32_0 : i32, i32
  }
  func.func @transform_5(%arg0: i32) -> (i32, i32) {
    %c0_i32 = arith.constant 0 : i32
    %c0_i32_0 = arith.constant 0 : i32
    return %c0_i32, %arg0 : i32, i32
  }
}

</mosaic_0001>

<llo_original>
// kernel: tpu_custom_call.1
$region0: #{tpu_custom_call.1}
  #allocation0 [shape = 'u32[]', space=smem, size = 0x4, offset = 0x4, fixed_abs, tag = 'smem constant byte address 0x4 - core index']
  #allocation1 [shape = 'u32[72,128]{1,0:T(1,128)}', space=vmem, size = 0x9000, scoped, tag = 'internal scratch']
  %s0 = inlined_call_operand.vmem [shape: f32[8,256], index: 0, kind: input, shape index: {}]
  %s1 = inlined_call_operand.vmem [shape: bf16[512,8], index: 1, kind: input, shape index: {}]
  %s2 = inlined_call_operand.vmem [shape: f32[512,1], index: 2, kind: input, shape index: {}]
  %s3 = inlined_call_operand.vmem [shape: bf16[8,512], index: 3, kind: input, shape index: {}]
  %s4 = inlined_call_operand.vmem [shape: f32[8,1], index: 4, kind: input, shape index: {}]
  %s5 = inlined_call_operand.hbm [shape: f32[8,256], index: 5, kind: output, shape index: {}]
  %s6 = sld [smem:[#allocation0]]
  $region53: #{tpu_custom_call.1} parent=0
    _
  %s8 = ssub.s32 1, %s6
  %s9 = scalar_select 0, %s8, %s6
  $region1: #{tpu_custom_call.1} parent=0
    #allocation2 [shape = 'u8[8192]{0}', space=vmem, size = 0x2000, scoped, tag = 'output window, operand 0']
    #allocation3 [shape = 's32[2]{0}', space=sflag, size = 0x8, scoped, tag = 'scoped memory for tpu_custom_call.1']
    %10 = vsyncpa [#allocation3], 0
    %s11 = scalar_lea.sflag [#allocation3], 1
    %12 = vsyncpa %s11, 0
    loop: start=0, step=1, limit=4
    $region2: #{tpu_custom_call.1} parent=1 // loop_pre_header
      _
    $region3: #{tpu_custom_call.1} parent=1 // loop_header
      %s14 = sphi 0, %s18
      %p15 = scmp.ge.s32.totalorder %s14, 4
      %s24 = sphi 0, %s26
      %s27 = sphi 0, %s24
      %s28 = sphi 0, %s27
      %s44 = sphi 0, %s28
      %s48 = sphi 0, %s48
      %s50 = sphi 0, %s48
      %s51 = sphi 0, %s50
      %s65 = sphi 0, %s51
      %s69 = sphi 0, %s69
      %s71 = sphi 0, %s69
      %s72 = sphi 0, %s71
      %s86 = sphi 0, %s72
      %s90 = sphi 0, %s90
      %s92 = sphi 0, %s90
      %s93 = sphi 0, %s92
      %s107 = sphi 0, %s93
      %s111 = sphi 0, %s111
      %s113 = sphi 0, %s111
      %s114 = sphi 0, %s113
      %s128 = sphi 0, %s114
      %s134 = sphi 0, %s136
      %s137 = sphi 0, %s134
      %s138 = sphi 0, %s137
      %s154 = sphi 0, %s138
    $region4: #{tpu_custom_call.1} parent=1 // loop_header_branch
      %17 = sbr.rel (%p15) target = $region8
    $region5: #{tpu_custom_call.1} parent=1 // loop_body
      %s19 = ssub.s32 %s14, 1
      %s20 = ssub.s32 %s14, 2
      %s21 = sadd.s32 %s14, 1
      %s22 = ssub.s32 %s14, %s21
      %p23 = scmp.eq.s32.totalorder %s22, 0
      %s25 = sadd.s32 %s24, 1
      %s26 = scalar_select %p23, %s24, %s25
      %p29 = pneg %p23
      %p30 = scmp.eq.s32.totalorder %s14, 1
      %p31 = por %p29, %p30
      %p32 = scmp.ne.s32.totalorder %s24, %s27
      %p33 = scmp.eq.s32.totalorder %s14, 0
      %p34 = por %p32, %p33
      %p35 = scmp.ne.s32.totalorder %s24, %s27
      %p36 = scmp.eq.s32.totalorder %s19, 1
      %p37 = por %p35, %p36
      %p38 = scmp.ne.s32.totalorder %s27, %s28
      %p39 = scmp.eq.s32.totalorder %s19, 0
      %p40 = por %p38, %p39
      %p41 = scmp.ne.s32.totalorder %s27, %s28
      %p42 = scmp.eq.s32.totalorder %s20, 1
      %p43 = por %p41, %p42
      %p45 = scmp.ne.s32.totalorder %s28, %s44
      %p46 = scmp.eq.s32.totalorder %s20, 0
      %p47 = por %p45, %p46
      %s49 = sadd.s32 %s48, 1
      %p52 = scmp.eq.s32.totalorder %s14, 1
      %p53 = scmp.ne.s32.totalorder %s48, %s50
      %p54 = scmp.eq.s32.totalorder %s14, 0
      %p55 = por %p53, %p54
      %p56 = scmp.ne.s32.totalorder %s48, %s50
      %p57 = scmp.eq.s32.totalorder %s19, 1
      %p58 = por %p56, %p57
      %p59 = scmp.ne.s32.totalorder %s50, %s51
      %p60 = scmp.eq.s32.totalorder %s19, 0
      %p61 = por %p59, %p60
      %p62 = scmp.ne.s32.totalorder %s50, %s51
      %p63 = scmp.eq.s32.totalorder %s20, 1
      %p64 = por %p62, %p63
      %p66 = scmp.ne.s32.totalorder %s51, %s65
      %p67 = scmp.eq.s32.totalorder %s20, 0
      %p68 = por %p66, %p67
      %s70 = sadd.s32 %s69, 1
      %p73 = scmp.eq.s32.totalorder %s14, 1
      %p74 = scmp.ne.s32.totalorder %s69, %s71
      %p75 = scmp.eq.s32.totalorder %s14, 0
      %p76 = por %p74, %p75
      %p77 = scmp.ne.s32.totalorder %s69, %s71
      %p78 = scmp.eq.s32.totalorder %s19, 1
      %p79 = por %p77, %p78
      %p80 = scmp.ne.s32.totalorder %s71, %s72
      %p81 = scmp.eq.s32.totalorder %s19, 0
      %p82 = por %p80, %p81
      %p83 = scmp.ne.s32.totalorder %s71, %s72
      %p84 = scmp.eq.s32.totalorder %s20, 1
      %p85 = por %p83, %p84
      %p87 = scmp.ne.s32.totalorder %s72, %s86
      %p88 = scmp.eq.s32.totalorder %s20, 0
      %p89 = por %p87, %p88
      %s91 = sadd.s32 %s90, 1
      %p94 = scmp.eq.s32.totalorder %s14, 1
      %p95 = scmp.ne.s32.totalorder %s90, %s92
      %p96 = scmp.eq.s32.totalorder %s14, 0
      %p97 = por %p95, %p96
      %p98 = scmp.ne.s32.totalorder %s90, %s92
      %p99 = scmp.eq.s32.totalorder %s19, 1
      %p100 = por %p98, %p99
      %p101 = scmp.ne.s32.totalorder %s92, %s93
      %p102 = scmp.eq.s32.totalorder %s19, 0
      %p103 = por %p101, %p102
      %p104 = scmp.ne.s32.totalorder %s92, %s93
      %p105 = scmp.eq.s32.totalorder %s20, 1
      %p106 = por %p104, %p105
      %p108 = scmp.ne.s32.totalorder %s93, %s107
      %p109 = scmp.eq.s32.totalorder %s20, 0
      %p110 = por %p108, %p109
      %s112 = sadd.s32 %s111, 1
      %p115 = scmp.eq.s32.totalorder %s14, 1
      %p116 = scmp.ne.s32.totalorder %s111, %s113
      %p117 = scmp.eq.s32.totalorder %s14, 0
      %p118 = por %p116, %p117
      %p119 = scmp.ne.s32.totalorder %s111, %s113
      %p120 = scmp.eq.s32.totalorder %s19, 1
      %p121 = por %p119, %p120
      %p122 = scmp.ne.s32.totalorder %s113, %s114
      %p123 = scmp.eq.s32.totalorder %s19, 0
      %p124 = por %p122, %p123
      %p125 = scmp.ne.s32.totalorder %s113, %s114
      %p126 = scmp.eq.s32.totalorder %s20, 1
      %p127 = por %p125, %p126
      %p129 = scmp.ne.s32.totalorder %s114, %s128
      %p130 = scmp.eq.s32.totalorder %s20, 0
      %p131 = por %p129, %p130
      %s132 = ssub.s32 %s14, %s21
      %p133 = scmp.eq.s32.totalorder %s132, 0
      %s135 = sadd.s32 %s134, 1
      %s136 = scalar_select %p133, %s134, %s135
      %p139 = pneg %p133
      %p140 = scmp.eq.s32.totalorder %s14, 1
      %p141 = por %p139, %p140
      %p142 = scmp.ne.s32.totalorder %s134, %s137
      %p143 = scmp.eq.s32.totalorder %s14, 0
      %p144 = por %p142, %p143
      %p145 = scmp.ne.s32.totalorder %s134, %s137
      %p146 = scmp.eq.s32.totalorder %s19, 1
      %p147 = por %p145, %p146
      %p148 = scmp.ne.s32.totalorder %s137, %s138
      %p149 = scmp.eq.s32.totalorder %s19, 0
      %p150 = por %p148, %p149
      %p151 = scmp.ne.s32.totalorder %s137, %s138
      %p152 = scmp.eq.s32.totalorder %s20, 1
      %p153 = por %p151, %p152
      %p155 = scmp.ne.s32.totalorder %s138, %s154
      %p156 = scmp.eq.s32.totalorder %s20, 0
      %p157 = por %p155, %p156
      %p158 = scmp.le.s32.totalorder 1, %s14
      %p159 = scmp.lt.s32.totalorder %s14, 3
      %p160 = pnand %p158, %p159
      %p161 = pneg %p160
      // Predicated region
      $region9: #{tpu_custom_call.1} parent=5 // pred_check
        _
      $region10: #{tpu_custom_call.1} parent=5 // pred_check_branch
        %163 = sbr.rel (%p160) target = $region12
      $region11: #{tpu_custom_call.1} parent=5 // pred_region
        %s164 = ssub.s32 %s14, 1
        // Predicated region
        $region13: #{tpu_custom_call.1} parent=11 // pred_check
          %p165 = pneg %p61
        $region14: #{tpu_custom_call.1} parent=11 // pred_check_branch
          %167 = sbr.rel (%p165) target = $region16
        $region15: #{tpu_custom_call.1} parent=11 // pred_region
          _
        $region16: #{tpu_custom_call.1} parent=11 // pred_fallthru
          _
        // Predicated region
        $region17: #{tpu_custom_call.1} parent=11 // pred_check
          %p168 = pneg %p82
        $region18: #{tpu_custom_call.1} parent=11 // pred_check_branch
          %170 = sbr.rel (%p168) target = $region20
        $region19: #{tpu_custom_call.1} parent=11 // pred_region
          _
        $region20: #{tpu_custom_call.1} parent=11 // pred_fallthru
          _
        // Predicated region
        $region21: #{tpu_custom_call.1} parent=11 // pred_check
          %p171 = pneg %p103
        $region22: #{tpu_custom_call.1} parent=11 // pred_check_branch
          %173 = sbr.rel (%p171) target = $region24
        $region23: #{tpu_custom_call.1} parent=11 // pred_region
          _
        $region24: #{tpu_custom_call.1} parent=11 // pred_fallthru
          _
        // Predicated region
        $region25: #{tpu_custom_call.1} parent=11 // pred_check
          %p174 = pneg %p124
        $region26: #{tpu_custom_call.1} parent=11 // pred_check_branch
          %176 = sbr.rel (%p174) target = $region28
        $region27: #{tpu_custom_call.1} parent=11 // pred_region
          _
        $region28: #{tpu_custom_call.1} parent=11 // pred_fallthru
          _
      $region12: #{tpu_custom_call.1} parent=5 // pred_fallthru
        _
      %p177 = scmp.lt.s32.totalorder %s14, 2
      // Predicated region
      $region29: #{tpu_custom_call.1} parent=5 // pred_check
        %p178 = pneg %p177
      $region30: #{tpu_custom_call.1} parent=5 // pred_check_branch
        %180 = sbr.rel (%p178) target = $region32
      $region31: #{tpu_custom_call.1} parent=5 // pred_region
        // Predicated region
        $region33: #{tpu_custom_call.1} parent=31 // pred_check
          %p181 = pneg %p34
        $region34: #{tpu_custom_call.1} parent=31 // pred_check_branch
          %183 = sbr.rel (%p181) target = $region36
        $region35: #{tpu_custom_call.1} parent=31 // pred_region
          %p184 = scmp.lt.s32.totalorder %s14, 1
          %s185 = scalar_select %p184, %s14, 1
          %s186 = smul.addr %s185, 8
          %s187 = scalar_lea.vmem %s0, %s186
        $region36: #{tpu_custom_call.1} parent=31 // pred_fallthru
          _
      $region32: #{tpu_custom_call.1} parent=5 // pred_fallthru
        _
      %p188 = scmp.le.s32.totalorder 1, %s14
      %p189 = scmp.lt.s32.totalorder %s14, 3
      %p190 = pnand %p188, %p189
      %p191 = pneg %p190
      // Predicated region
      $region37: #{tpu_custom_call.1} parent=5 // pred_check
        _
      $region38: #{tpu_custom_call.1} parent=5 // pred_check_branch
        %193 = sbr.rel (%p190) target = $region40
      $region39: #{tpu_custom_call.1} parent=5 // pred_region
        %s194 = ssub.s32 %s14, 1
        %p195 = scmp.lt.s32.totalorder %s19, 1
        %s196 = scalar_select %p195, %s19, 1
        %s197 = smul.addr %s196, 8
        %s198 = scalar_lea.vmem %s0, %s197
        %p199 = pneg %p40
        %p200 = pneg %p37
        %p201 = pneg %p61
        %p202 = pneg %p58
        %p203 = pneg %p82
        %p204 = pneg %p79
        %p205 = pneg %p103
        %p206 = pneg %p100
        %p207 = pneg %p124
        %p208 = pneg %p121
        %p209 = pneg %p150
        %p210 = pneg %p147
        %s211 = sand.u32 %s137, 1
        %s212 = scalar_lea.sflag [#allocation3], %s211
        %s213 = sand.u32 %s137, 1
        %s214 = smul.addr %s213, 8
        %s215 = scalar_lea.vmem [#allocation2], %s214
        %p216 = scmp.lt.s32.totalorder %s19, 1
        %s217 = scalar_select %p216, %s19, 1
        %s218 = smul.addr %s217, 8
        %s219 = scalar_lea.vmem %s0, %s218
        %v221 = vld [vmem:[%s219] sm:$0xff]
        %v222 = vpack.c.bf16 %v221, %v221
        %v223 = vld [vmem:[%s1] sm:$0xf]
        %v224 = vld [vmem:[%s1 + $0x4] sm:$0xf]
        %v225 = vld [vmem:[%s1 + $0x8] sm:$0xf]
        %v226 = vld [vmem:[%s1 + $0xc] sm:$0xf]
        %v227 = vld [vmem:[%s1 + $0x10] sm:$0xf]
        %v228 = vld [vmem:[%s1 + $0x14] sm:$0xf]
        %v229 = vld [vmem:[%s1 + $0x18] sm:$0xf]
        %v230 = vld [vmem:[%s1 + $0x1c] sm:$0xf]
        %v231 = vld [vmem:[%s1 + $0x20] sm:$0xf]
        %v232 = vld [vmem:[%s1 + $0x24] sm:$0xf]
        %v233 = vld [vmem:[%s1 + $0x28] sm:$0xf]
        %v234 = vld [vmem:[%s1 + $0x2c] sm:$0xf]
        %v235 = vld [vmem:[%s1 + $0x30] sm:$0xf]
        %v236 = vld [vmem:[%s1 + $0x34] sm:$0xf]
        %v237 = vld [vmem:[%s1 + $0x38] sm:$0xf]
        %v238 = vld [vmem:[%s1 + $0x3c] sm:$0xf]
        %v239 = vld [vmem:[%s1 + $0x40] sm:$0xf]
        %v240 = vld [vmem:[%s1 + $0x44] sm:$0xf]
        %v241 = vld [vmem:[%s1 + $0x48] sm:$0xf]
        %v242 = vld [vmem:[%s1 + $0x4c] sm:$0xf]
        %v243 = vld [vmem:[%s1 + $0x50] sm:$0xf]
        %v244 = vld [vmem:[%s1 + $0x54] sm:$0xf]
        %v245 = vld [vmem:[%s1 + $0x58] sm:$0xf]
        %v246 = vld [vmem:[%s1 + $0x5c] sm:$0xf]
        %v247 = vld [vmem:[%s1 + $0x60] sm:$0xf]
        %v248 = vld [vmem:[%s1 + $0x64] sm:$0xf]
        %v249 = vld [vmem:[%s1 + $0x68] sm:$0xf]
        %v250 = vld [vmem:[%s1 + $0x6c] sm:$0xf]
        %v251 = vld [vmem:[%s1 + $0x70] sm:$0xf]
        %v252 = vld [vmem:[%s1 + $0x74] sm:$0xf]
        %v253 = vld [vmem:[%s1 + $0x78] sm:$0xf]
        %v254 = vld [vmem:[%s1 + $0x7c] sm:$0xf]
        %v255 = vld [vmem:[%s1 + $0x80] sm:$0xf]
        %v256 = vld [vmem:[%s1 + $0x84] sm:$0xf]
        %v257 = vld [vmem:[%s1 + $0x88] sm:$0xf]
        %v258 = vld [vmem:[%s1 + $0x8c] sm:$0xf]
        %v259 = vld [vmem:[%s1 + $0x90] sm:$0xf]
        %v260 = vld [vmem:[%s1 + $0x94] sm:$0xf]
        %v261 = vld [vmem:[%s1 + $0x98] sm:$0xf]
        %v262 = vld [vmem:[%s1 + $0x9c] sm:$0xf]
        %v263 = vld [vmem:[%s1 + $0xa0] sm:$0xf]
        %v264 = vld [vmem:[%s1 + $0xa4] sm:$0xf]
        %v265 = vld [vmem:[%s1 + $0xa8] sm:$0xf]
        %v266 = vld [vmem:[%s1 + $0xac] sm:$0xf]
        %v267 = vld [vmem:[%s1 + $0xb0] sm:$0xf]
        %v268 = vld [vmem:[%s1 + $0xb4] sm:$0xf]
        %v269 = vld [vmem:[%s1 + $0xb8] sm:$0xf]
        %v270 = vld [vmem:[%s1 + $0xbc] sm:$0xf]
        %v271 = vld [vmem:[%s1 + $0xc0] sm:$0xf]
        %v272 = vld [vmem:[%s1 + $0xc4] sm:$0xf]
        %v273 = vld [vmem:[%s1 + $0xc8] sm:$0xf]
        %v274 = vld [vmem:[%s1 + $0xcc] sm:$0xf]
        %v275 = vld [vmem:[%s1 + $0xd0] sm:$0xf]
        %v276 = vld [vmem:[%s1 + $0xd4] sm:$0xf]
        %v277 = vld [vmem:[%s1 + $0xd8] sm:$0xf]
        %v278 = vld [vmem:[%s1 + $0xdc] sm:$0xf]
        %v279 = vld [vmem:[%s1 + $0xe0] sm:$0xf]
        %v280 = vld [vmem:[%s1 + $0xe4] sm:$0xf]
        %v281 = vld [vmem:[%s1 + $0xe8] sm:$0xf]
        %v282 = vld [vmem:[%s1 + $0xec] sm:$0xf]
        %v283 = vld [vmem:[%s1 + $0xf0] sm:$0xf]
        %v284 = vld [vmem:[%s1 + $0xf4] sm:$0xf]
        %v285 = vld [vmem:[%s1 + $0xf8] sm:$0xf]
        %v286 = vld [vmem:[%s1 + $0xfc] sm:$0xf]
        %v287 = vld [vmem:[%s2] sm:$0xff]
        %v288 = vld [vmem:[%s2 + $0x8] sm:$0xff]
        %v289 = vld [vmem:[%s2 + $0x10] sm:$0xff]
        %v290 = vld [vmem:[%s2 + $0x18] sm:$0xff]
        %v291 = vld [vmem:[%s2 + $0x20] sm:$0xff]
        %v292 = vld [vmem:[%s2 + $0x28] sm:$0xff]
        %v293 = vld [vmem:[%s2 + $0x30] sm:$0xff]
        %v294 = vld [vmem:[%s2 + $0x38] sm:$0xff]
        %v295 = vld [vmem:[%s2 + $0x40] sm:$0xff]
        %v296 = vld [vmem:[%s2 + $0x48] sm:$0xff]
        %v297 = vld [vmem:[%s2 + $0x50] sm:$0xff]
        %v298 = vld [vmem:[%s2 + $0x58] sm:$0xff]
        %v299 = vld [vmem:[%s2 + $0x60] sm:$0xff]
        %v300 = vld [vmem:[%s2 + $0x68] sm:$0xff]
        %v301 = vld [vmem:[%s2 + $0x70] sm:$0xff]
        %v302 = vld [vmem:[%s2 + $0x78] sm:$0xff]
        %v303 = vld [vmem:[%s2 + $0x80] sm:$0xff]
        %v304 = vld [vmem:[%s2 + $0x88] sm:$0xff]
        %v305 = vld [vmem:[%s2 + $0x90] sm:$0xff]
        %v306 = vld [vmem:[%s2 + $0x98] sm:$0xff]
        %v307 = vld [vmem:[%s2 + $0xa0] sm:$0xff]
        %v308 = vld [vmem:[%s2 + $0xa8] sm:$0xff]
        %v309 = vld [vmem:[%s2 + $0xb0] sm:$0xff]
        %v310 = vld [vmem:[%s2 + $0xb8] sm:$0xff]
        %v311 = vld [vmem:[%s2 + $0xc0] sm:$0xff]
        %v312 = vld [vmem:[%s2 + $0xc8] sm:$0xff]
        %v313 = vld [vmem:[%s2 + $0xd0] sm:$0xff]
        %v314 = vld [vmem:[%s2 + $0xd8] sm:$0xff]
        %v315 = vld [vmem:[%s2 + $0xe0] sm:$0xff]
        %v316 = vld [vmem:[%s2 + $0xe8] sm:$0xff]
        %v317 = vld [vmem:[%s2 + $0xf0] sm:$0xff]
        %v318 = vld [vmem:[%s2 + $0xf8] sm:$0xff]
        %v319 = vld [vmem:[%s2 + $0x100] sm:$0xff]
        %v320 = vld [vmem:[%s2 + $0x108] sm:$0xff]
        %v321 = vld [vmem:[%s2 + $0x110] sm:$0xff]
        %v322 = vld [vmem:[%s2 + $0x118] sm:$0xff]
        %v323 = vld [vmem:[%s2 + $0x120] sm:$0xff]
        %v324 = vld [vmem:[%s2 + $0x128] sm:$0xff]
        %v325 = vld [vmem:[%s2 + $0x130] sm:$0xff]
        %v326 = vld [vmem:[%s2 + $0x138] sm:$0xff]
        %v327 = vld [vmem:[%s2 + $0x140] sm:$0xff]
        %v328 = vld [vmem:[%s2 + $0x148] sm:$0xff]
        %v329 = vld [vmem:[%s2 + $0x150] sm:$0xff]
        %v330 = vld [vmem:[%s2 + $0x158] sm:$0xff]
        %v331 = vld [vmem:[%s2 + $0x160] sm:$0xff]
        %v332 = vld [vmem:[%s2 + $0x168] sm:$0xff]
        %v333 = vld [vmem:[%s2 + $0x170] sm:$0xff]
        %v334 = vld [vmem:[%s2 + $0x178] sm:$0xff]
        %v335 = vld [vmem:[%s2 + $0x180] sm:$0xff]
        %v336 = vld [vmem:[%s2 + $0x188] sm:$0xff]
        %v337 = vld [vmem:[%s2 + $0x190] sm:$0xff]
        %v338 = vld [vmem:[%s2 + $0x198] sm:$0xff]
        %v339 = vld [vmem:[%s2 + $0x1a0] sm:$0xff]
        %v340 = vld [vmem:[%s2 + $0x1a8] sm:$0xff]
        %v341 = vld [vmem:[%s2 + $0x1b0] sm:$0xff]
        %v342 = vld [vmem:[%s2 + $0x1b8] sm:$0xff]
        %v343 = vld [vmem:[%s2 + $0x1c0] sm:$0xff]
        %v344 = vld [vmem:[%s2 + $0x1c8] sm:$0xff]
        %v345 = vld [vmem:[%s2 + $0x1d0] sm:$0xff]
        %v346 = vld [vmem:[%s2 + $0x1d8] sm:$0xff]
        %v347 = vld [vmem:[%s2 + $0x1e0] sm:$0xff]
        %v348 = vld [vmem:[%s2 + $0x1e8] sm:$0xff]
        %v349 = vld [vmem:[%s2 + $0x1f0] sm:$0xff]
        %v350 = vld [vmem:[%s2 + $0x1f8] sm:$0xff]
        %352 = vset.pattern.permute.xlu0 0
        %353 = vperm.xlu0 %352, %v287
        %v354 = vpop.permute.xlu0 %353
        %357 = vset.pattern.permute.xlu0 0
        %358 = vperm.xlu0 %357, %v288
        %v359 = vpop.permute.xlu0 %358
        %362 = vset.pattern.permute.xlu0 0
        %363 = vperm.xlu0 %362, %v289
        %v364 = vpop.permute.xlu0 %363
        %367 = vset.pattern.permute.xlu0 0
        %368 = vperm.xlu0 %367, %v290
        %v369 = vpop.permute.xlu0 %368
        %372 = vset.pattern.permute.xlu0 0
        %373 = vperm.xlu0 %372, %v291
        %v374 = vpop.permute.xlu0 %373
        %377 = vset.pattern.permute.xlu0 0
        %378 = vperm.xlu0 %377, %v292
        %v379 = vpop.permute.xlu0 %378
        %382 = vset.pattern.permute.xlu0 0
        %383 = vperm.xlu0 %382, %v293
        %v384 = vpop.permute.xlu0 %383
        %387 = vset.pattern.permute.xlu0 0
        %388 = vperm.xlu0 %387, %v294
        %v389 = vpop.permute.xlu0 %388
        %392 = vset.pattern.permute.xlu0 0
        %393 = vperm.xlu0 %392, %v295
        %v394 = vpop.permute.xlu0 %393
        %397 = vset.pattern.permute.xlu0 0
        %398 = vperm.xlu0 %397, %v296
        %v399 = vpop.permute.xlu0 %398
        %402 = vset.pattern.permute.xlu0 0
        %403 = vperm.xlu0 %402, %v297
        %v404 = vpop.permute.xlu0 %403
        %407 = vset.pattern.permute.xlu0 0
        %408 = vperm.xlu0 %407, %v298
        %v409 = vpop.permute.xlu0 %408
        %412 = vset.pattern.permute.xlu0 0
        %413 = vperm.xlu0 %412, %v299
        %v414 = vpop.permute.xlu0 %413
        %417 = vset.pattern.permute.xlu0 0
        %418 = vperm.xlu0 %417, %v300
        %v419 = vpop.permute.xlu0 %418
        %422 = vset.pattern.permute.xlu0 0
        %423 = vperm.xlu0 %422, %v301
        %v424 = vpop.permute.xlu0 %423
        %427 = vset.pattern.permute.xlu0 0
        %428 = vperm.xlu0 %427, %v302
        %v429 = vpop.permute.xlu0 %428
        %432 = vset.pattern.permute.xlu0 0
        %433 = vperm.xlu0 %432, %v303
        %v434 = vpop.permute.xlu0 %433
        %437 = vset.pattern.permute.xlu0 0
        %438 = vperm.xlu0 %437, %v304
        %v439 = vpop.permute.xlu0 %438
        %442 = vset.pattern.permute.xlu0 0
        %443 = vperm.xlu0 %442, %v305
        %v444 = vpop.permute.xlu0 %443
        %447 = vset.pattern.permute.xlu0 0
        %448 = vperm.xlu0 %447, %v306
        %v449 = vpop.permute.xlu0 %448
        %452 = vset.pattern.permute.xlu0 0
        %453 = vperm.xlu0 %452, %v307
        %v454 = vpop.permute.xlu0 %453
        %457 = vset.pattern.permute.xlu0 0
        %458 = vperm.xlu0 %457, %v308
        %v459 = vpop.permute.xlu0 %458
        %462 = vset.pattern.permute.xlu0 0
        %463 = vperm.xlu0 %462, %v309
        %v464 = vpop.permute.xlu0 %463
        %467 = vset.pattern.permute.xlu0 0
        %468 = vperm.xlu0 %467, %v310
        %v469 = vpop.permute.xlu0 %468
        %472 = vset.pattern.permute.xlu0 0
        %473 = vperm.xlu0 %472, %v311
        %v474 = vpop.permute.xlu0 %473
        %477 = vset.pattern.permute.xlu0 0
        %478 = vperm.xlu0 %477, %v312
        %v479 = vpop.permute.xlu0 %478
        %482 = vset.pattern.permute.xlu0 0
        %483 = vperm.xlu0 %482, %v313
        %v484 = vpop.permute.xlu0 %483
        %487 = vset.pattern.permute.xlu0 0
        %488 = vperm.xlu0 %487, %v314
        %v489 = vpop.permute.xlu0 %488
        %492 = vset.pattern.permute.xlu0 0
        %493 = vperm.xlu0 %492, %v315
        %v494 = vpop.permute.xlu0 %493
        %497 = vset.pattern.permute.xlu0 0
        %498 = vperm.xlu0 %497, %v316
        %v499 = vpop.permute.xlu0 %498
        %502 = vset.pattern.permute.xlu0 0
        %503 = vperm.xlu0 %502, %v317
        %v504 = vpop.permute.xlu0 %503
        %507 = vset.pattern.permute.xlu0 0
        %508 = vperm.xlu0 %507, %v318
        %v509 = vpop.permute.xlu0 %508
        %512 = vset.pattern.permute.xlu0 0
        %513 = vperm.xlu0 %512, %v319
        %v514 = vpop.permute.xlu0 %513
        %517 = vset.pattern.permute.xlu0 0
        %518 = vperm.xlu0 %517, %v320
        %v519 = vpop.permute.xlu0 %518
        %522 = vset.pattern.permute.xlu0 0
        %523 = vperm.xlu0 %522, %v321
        %v524 = vpop.permute.xlu0 %523
        %527 = vset.pattern.permute.xlu0 0
        %528 = vperm.xlu0 %527, %v322
        %v529 = vpop.permute.xlu0 %528
        %532 = vset.pattern.permute.xlu0 0
        %533 = vperm.xlu0 %532, %v323
        %v534 = vpop.permute.xlu0 %533
        %537 = vset.pattern.permute.xlu0 0
        %538 = vperm.xlu0 %537, %v324
        %v539 = vpop.permute.xlu0 %538
        %542 = vset.pattern.permute.xlu0 0
        %543 = vperm.xlu0 %542, %v325
        %v544 = vpop.permute.xlu0 %543
        %547 = vset.pattern.permute.xlu0 0
        %548 = vperm.xlu0 %547, %v326
        %v549 = vpop.permute.xlu0 %548
        %552 = vset.pattern.permute.xlu0 0
        %553 = vperm.xlu0 %552, %v327
        %v554 = vpop.permute.xlu0 %553
        %557 = vset.pattern.permute.xlu0 0
        %558 = vperm.xlu0 %557, %v328
        %v559 = vpop.permute.xlu0 %558
        %562 = vset.pattern.permute.xlu0 0
        %563 = vperm.xlu0 %562, %v329
        %v564 = vpop.permute.xlu0 %563
        %567 = vset.pattern.permute.xlu0 0
        %568 = vperm.xlu0 %567, %v330
        %v569 = vpop.permute.xlu0 %568
        %572 = vset.pattern.permute.xlu0 0
        %573 = vperm.xlu0 %572, %v331
        %v574 = vpop.permute.xlu0 %573
        %577 = vset.pattern.permute.xlu0 0
        %578 = vperm.xlu0 %577, %v332
        %v579 = vpop.permute.xlu0 %578
        %582 = vset.pattern.permute.xlu0 0
        %583 = vperm.xlu0 %582, %v333
        %v584 = vpop.permute.xlu0 %583
        %587 = vset.pattern.permute.xlu0 0
        %588 = vperm.xlu0 %587, %v334
        %v589 = vpop.permute.xlu0 %588
        %592 = vset.pattern.permute.xlu0 0
        %593 = vperm.xlu0 %592, %v335
        %v594 = vpop.permute.xlu0 %593
        %597 = vset.pattern.permute.xlu0 0
        %598 = vperm.xlu0 %597, %v336
        %v599 = vpop.permute.xlu0 %598
        %602 = vset.pattern.permute.xlu0 0
        %603 = vperm.xlu0 %602, %v337
        %v604 = vpop.permute.xlu0 %603
        %607 = vset.pattern.permute.xlu0 0
        %608 = vperm.xlu0 %607, %v338
        %v609 = vpop.permute.xlu0 %608
        %612 = vset.pattern.permute.xlu0 0
        %613 = vperm.xlu0 %612, %v339
        %v614 = vpop.permute.xlu0 %613
        %617 = vset.pattern.permute.xlu0 0
        %618 = vperm.xlu0 %617, %v340
        %v619 = vpop.permute.xlu0 %618
        %622 = vset.pattern.permute.xlu0 0
        %623 = vperm.xlu0 %622, %v341
        %v624 = vpop.permute.xlu0 %623
        %627 = vset.pattern.permute.xlu0 0
        %628 = vperm.xlu0 %627, %v342
        %v629 = vpop.permute.xlu0 %628
        %632 = vset.pattern.permute.xlu0 0
        %633 = vperm.xlu0 %632, %v343
        %v634 = vpop.permute.xlu0 %633
        %637 = vset.pattern.permute.xlu0 0
        %638 = vperm.xlu0 %637, %v344
        %v639 = vpop.permute.xlu0 %638
        %642 = vset.pattern.permute.xlu0 0
        %643 = vperm.xlu0 %642, %v345
        %v644 = vpop.permute.xlu0 %643
        %647 = vset.pattern.permute.xlu0 0
        %648 = vperm.xlu0 %647, %v346
        %v649 = vpop.permute.xlu0 %648
        %652 = vset.pattern.permute.xlu0 0
        %653 = vperm.xlu0 %652, %v347
        %v654 = vpop.permute.xlu0 %653
        %657 = vset.pattern.permute.xlu0 0
        %658 = vperm.xlu0 %657, %v348
        %v659 = vpop.permute.xlu0 %658
        %662 = vset.pattern.permute.xlu0 0
        %663 = vperm.xlu0 %662, %v349
        %v664 = vpop.permute.xlu0 %663
        %667 = vset.pattern.permute.xlu0 0
        %668 = vperm.xlu0 %667, %v350
        %v669 = vpop.permute.xlu0 %668
        %v735 = vunpack.c.l.b16 %v223
        %v736 = vunpack.c.l.b16 %v224
        %v737 = vunpack.c.l.b16 %v225
        %v738 = vunpack.c.l.b16 %v226
        %v739 = vunpack.c.l.b16 %v227
        %v740 = vunpack.c.l.b16 %v228
        %v741 = vunpack.c.l.b16 %v229
        %v742 = vunpack.c.l.b16 %v230
        %v743 = vunpack.c.l.b16 %v231
        %v744 = vunpack.c.l.b16 %v232
        %v745 = vunpack.c.l.b16 %v233
        %v746 = vunpack.c.l.b16 %v234
        %v747 = vunpack.c.l.b16 %v235
        %v748 = vunpack.c.l.b16 %v236
        %v749 = vunpack.c.l.b16 %v237
        %v750 = vunpack.c.l.b16 %v238
        %v751 = vunpack.c.l.b16 %v239
        %v752 = vunpack.c.l.b16 %v240
        %v753 = vunpack.c.l.b16 %v241
        %v754 = vunpack.c.l.b16 %v242
        %v755 = vunpack.c.l.b16 %v243
        %v756 = vunpack.c.l.b16 %v244
        %v757 = vunpack.c.l.b16 %v245
        %v758 = vunpack.c.l.b16 %v246
        %v759 = vunpack.c.l.b16 %v247
        %v760 = vunpack.c.l.b16 %v248
        %v761 = vunpack.c.l.b16 %v249
        %v762 = vunpack.c.l.b16 %v250
        %v763 = vunpack.c.l.b16 %v251
        %v764 = vunpack.c.l.b16 %v252
        %v765 = vunpack.c.l.b16 %v253
        %v766 = vunpack.c.l.b16 %v254
        %v767 = vunpack.c.l.b16 %v255
        %v768 = vunpack.c.l.b16 %v256
        %v769 = vunpack.c.l.b16 %v257
        %v770 = vunpack.c.l.b16 %v258
        %v771 = vunpack.c.l.b16 %v259
        %v772 = vunpack.c.l.b16 %v260
        %v773 = vunpack.c.l.b16 %v261
        %v774 = vunpack.c.l.b16 %v262
        %v775 = vunpack.c.l.b16 %v263
        %v776 = vunpack.c.l.b16 %v264
        %v777 = vunpack.c.l.b16 %v265
        %v778 = vunpack.c.l.b16 %v266
        %v779 = vunpack.c.l.b16 %v267
        %v780 = vunpack.c.l.b16 %v268
        %v781 = vunpack.c.l.b16 %v269
        %v782 = vunpack.c.l.b16 %v270
        %v783 = vunpack.c.l.b16 %v271
        %v784 = vunpack.c.l.b16 %v272
        %v785 = vunpack.c.l.b16 %v273
        %v786 = vunpack.c.l.b16 %v274
        %v787 = vunpack.c.l.b16 %v275
        %v788 = vunpack.c.l.b16 %v276
        %v789 = vunpack.c.l.b16 %v277
        %v790 = vunpack.c.l.b16 %v278
        %v791 = vunpack.c.l.b16 %v279
        %v792 = vunpack.c.l.b16 %v280
        %v793 = vunpack.c.l.b16 %v281
        %v794 = vunpack.c.l.b16 %v282
        %v795 = vunpack.c.l.b16 %v283
        %v796 = vunpack.c.l.b16 %v284
        %v797 = vunpack.c.l.b16 %v285
        %v798 = vunpack.c.l.b16 %v286
        %v799 = vpack.c.b16 %v736, %v735
        %v800 = vpack.c.b16 %v738, %v737
        %v801 = vpack.c.b16 %v740, %v739
        %v802 = vpack.c.b16 %v742, %v741
        %v803 = vpack.c.b16 %v744, %v743
        %v804 = vpack.c.b16 %v746, %v745
        %v805 = vpack.c.b16 %v748, %v747
        %v806 = vpack.c.b16 %v750, %v749
        %v807 = vpack.c.b16 %v752, %v751
        %v808 = vpack.c.b16 %v754, %v753
        %v809 = vpack.c.b16 %v756, %v755
        %v810 = vpack.c.b16 %v758, %v757
        %v811 = vpack.c.b16 %v760, %v759
        %v812 = vpack.c.b16 %v762, %v761
        %v813 = vpack.c.b16 %v764, %v763
        %v814 = vpack.c.b16 %v766, %v765
        %v815 = vpack.c.b16 %v768, %v767
        %v816 = vpack.c.b16 %v770, %v769
        %v817 = vpack.c.b16 %v772, %v771
        %v818 = vpack.c.b16 %v774, %v773
        %v819 = vpack.c.b16 %v776, %v775
        %v820 = vpack.c.b16 %v778, %v777
        %v821 = vpack.c.b16 %v780, %v779
        %v822 = vpack.c.b16 %v782, %v781
        %v823 = vpack.c.b16 %v784, %v783
        %v824 = vpack.c.b16 %v786, %v785
        %v825 = vpack.c.b16 %v788, %v787
        %v826 = vpack.c.b16 %v790, %v789
        %v827 = vpack.c.b16 %v792, %v791
        %v828 = vpack.c.b16 %v794, %v793
        %v829 = vpack.c.b16 %v796, %v795
        %v830 = vpack.c.b16 %v798, %v797
        %vm831 = vcmask 64512
        %v833 = vsel %vm831, %v799, 0
        %v836 = vsel %vm831, %v800, 0
        %v839 = vsel %vm831, %v801, 0
        %v842 = vsel %vm831, %v802, 0
        %v845 = vsel %vm831, %v803, 0
        %v848 = vsel %vm831, %v804, 0
        %v851 = vsel %vm831, %v805, 0
        %v854 = vsel %vm831, %v806, 0
        %v857 = vsel %vm831, %v807, 0
        %v860 = vsel %vm831, %v808, 0
        %v863 = vsel %vm831, %v809, 0
        %v866 = vsel %vm831, %v810, 0
        %v869 = vsel %vm831, %v811, 0
        %v872 = vsel %vm831, %v812, 0
        %v875 = vsel %vm831, %v813, 0
        %v878 = vsel %vm831, %v814, 0
        %v881 = vsel %vm831, %v815, 0
        %v884 = vsel %vm831, %v816, 0
        %v887 = vsel %vm831, %v817, 0
        %v890 = vsel %vm831, %v818, 0
        %v893 = vsel %vm831, %v819, 0
        %v896 = vsel %vm831, %v820, 0
        %v899 = vsel %vm831, %v821, 0
        %v902 = vsel %vm831, %v822, 0
        %v905 = vsel %vm831, %v823, 0
        %v908 = vsel %vm831, %v824, 0
        %v911 = vsel %vm831, %v825, 0
        %v914 = vsel %vm831, %v826, 0
        %v917 = vsel %vm831, %v827, 0
        %v920 = vsel %vm831, %v828, 0
        %v923 = vsel %vm831, %v829, 0
        %v926 = vsel %vm831, %v830, 0
        %vm928 = vcmask 1043456
        %v930 = vsel %vm928, %v222, 0
        %932 = vmatpush.bf16.msra.mxu0 0
        %933 = vmatpush.bf16.msra.mxu0 0
        %934 = vmatpush.bf16.msra.mxu0 0
        %935 = vmatpush.bf16.msra.mxu0 0
        %936 = vmatpush.bf16.msra.mxu0 0
        %937 = vmatpush.bf16.msra.mxu0 0
        %938 = vmatpush.bf16.msra.mxu0 0
        %939 = vmatpush.bf16.msra.mxu0 %v930
        %940 = vmatmul.bf16.gmra.mxu0 %v833
        %v941 = vpop.f32.mrf.mxu0
        %v942 = vadd.f32 %v354, %v941
        %v943 = vpop.f32.mrf.mxu0
        %v944 = vadd.f32 %v359, %v943
        %945 = vmatmul.bf16.gmra.mxu0 %v836
        %v946 = vpop.f32.mrf.mxu0
        %v947 = vadd.f32 %v364, %v946
        %v948 = vpop.f32.mrf.mxu0
        %v949 = vadd.f32 %v369, %v948
        %950 = vmatmul.bf16.gmra.mxu0 %v839
        %v951 = vpop.f32.mrf.mxu0
        %v952 = vadd.f32 %v374, %v951
        %v953 = vpop.f32.mrf.mxu0
        %v954 = vadd.f32 %v379, %v953
        %955 = vmatmul.bf16.gmra.mxu0 %v842
        %v956 = vpop.f32.mrf.mxu0
        %v957 = vadd.f32 %v384, %v956
        %v958 = vpop.f32.mrf.mxu0
        %v959 = vadd.f32 %v389, %v958
        %960 = vmatmul.bf16.gmra.mxu0 %v845
        %v961 = vpop.f32.mrf.mxu0
        %v962 = vadd.f32 %v394, %v961
        %v963 = vpop.f32.mrf.mxu0
        %v964 = vadd.f32 %v399, %v963
        %965 = vmatmul.bf16.gmra.mxu0 %v848
        %v966 = vpop.f32.mrf.mxu0
        %v967 = vadd.f32 %v404, %v966
        %v968 = vpop.f32.mrf.mxu0
        %v969 = vadd.f32 %v409, %v968
        %970 = vmatmul.bf16.gmra.mxu0 %v851
        %v971 = vpop.f32.mrf.mxu0
        %v972 = vadd.f32 %v414, %v971
        %v973 = vpop.f32.mrf.mxu0
        %v974 = vadd.f32 %v419, %v973
        %975 = vmatmul.bf16.gmra.mxu0 %v854
        %v976 = vpop.f32.mrf.mxu0
        %v977 = vadd.f32 %v424, %v976
        %v978 = vpop.f32.mrf.mxu0
        %v979 = vadd.f32 %v429, %v978
        %980 = vmatmul.bf16.gmra.mxu0 %v857
        %v981 = vpop.f32.mrf.mxu0
        %v982 = vadd.f32 %v434, %v981
        %v983 = vpop.f32.mrf.mxu0
        %v984 = vadd.f32 %v439, %v983
        %985 = vmatmul.bf16.gmra.mxu0 %v860
        %v986 = vpop.f32.mrf.mxu0
        %v987 = vadd.f32 %v444, %v986
        %v988 = vpop.f32.mrf.mxu0
        %v989 = vadd.f32 %v449, %v988
        %990 = vmatmul.bf16.gmra.mxu0 %v863
        %v991 = vpop.f32.mrf.mxu0
        %v992 = vadd.f32 %v454, %v991
        %v993 = vpop.f32.mrf.mxu0
        %v994 = vadd.f32 %v459, %v993
        %995 = vmatmul.bf16.gmra.mxu0 %v866
        %v996 = vpop.f32.mrf.mxu0
        %v997 = vadd.f32 %v464, %v996
        %v998 = vpop.f32.mrf.mxu0
        %v999 = vadd.f32 %v469, %v998
        %1000 = vmatmul.bf16.gmra.mxu0 %v869
        %v1001 = vpop.f32.mrf.mxu0
        %v1002 = vadd.f32 %v474, %v1001
        %v1003 = vpop.f32.mrf.mxu0
        %v1004 = vadd.f32 %v479, %v1003
        %1005 = vmatmul.bf16.gmra.mxu0 %v872
        %v1006 = vpop.f32.mrf.mxu0
        %v1007 = vadd.f32 %v484, %v1006
        %v1008 = vpop.f32.mrf.mxu0
        %v1009 = vadd.f32 %v489, %v1008
        %1010 = vmatmul.bf16.gmra.mxu0 %v875
        %v1011 = vpop.f32.mrf.mxu0
        %v1012 = vadd.f32 %v494, %v1011
        %v1013 = vpop.f32.mrf.mxu0
        %v1014 = vadd.f32 %v499, %v1013
        %1015 = vmatmul.bf16.gmra.mxu0 %v878
        %v1016 = vpop.f32.mrf.mxu0
        %v1017 = vadd.f32 %v504, %v1016
        %v1018 = vpop.f32.mrf.mxu0
        %v1019 = vadd.f32 %v509, %v1018
        %1020 = vmatmul.bf16.gmra.mxu0 %v881
        %v1021 = vpop.f32.mrf.mxu0
        %v1022 = vadd.f32 %v514, %v1021
        %v1023 = vpop.f32.mrf.mxu0
        %v1024 = vadd.f32 %v519, %v1023
        %1025 = vmatmul.bf16.gmra.mxu0 %v884
        %v1026 = vpop.f32.mrf.mxu0
        %v1027 = vadd.f32 %v524, %v1026
        %v1028 = vpop.f32.mrf.mxu0
        %v1029 = vadd.f32 %v529, %v1028
        %1030 = vmatmul.bf16.gmra.mxu0 %v887
        %v1031 = vpop.f32.mrf.mxu0
        %v1032 = vadd.f32 %v534, %v1031
        %v1033 = vpop.f32.mrf.mxu0
        %v1034 = vadd.f32 %v539, %v1033
        %1035 = vmatmul.bf16.gmra.mxu0 %v890
        %v1036 = vpop.f32.mrf.mxu0
        %v1037 = vadd.f32 %v544, %v1036
        %v1038 = vpop.f32.mrf.mxu0
        %v1039 = vadd.f32 %v549, %v1038
        %1040 = vmatmul.bf16.gmra.mxu0 %v893
        %v1041 = vpop.f32.mrf.mxu0
        %v1042 = vadd.f32 %v554, %v1041
        %v1043 = vpop.f32.mrf.mxu0
        %v1044 = vadd.f32 %v559, %v1043
        %1045 = vmatmul.bf16.gmra.mxu0 %v896
        %v1046 = vpop.f32.mrf.mxu0
        %v1047 = vadd.f32 %v564, %v1046
        %v1048 = vpop.f32.mrf.mxu0
        %v1049 = vadd.f32 %v569, %v1048
        %1050 = vmatmul.bf16.gmra.mxu0 %v899
        %v1051 = vpop.f32.mrf.mxu0
        %v1052 = vadd.f32 %v574, %v1051
        %v1053 = vpop.f32.mrf.mxu0
        %v1054 = vadd.f32 %v579, %v1053
        %1055 = vmatmul.bf16.gmra.mxu0 %v902
        %v1056 = vpop.f32.mrf.mxu0
        %v1057 = vadd.f32 %v584, %v1056
        %v1058 = vpop.f32.mrf.mxu0
        %v1059 = vadd.f32 %v589, %v1058
        %1060 = vmatmul.bf16.gmra.mxu0 %v905
        %v1061 = vpop.f32.mrf.mxu0
        %v1062 = vadd.f32 %v594, %v1061
        %v1063 = vpop.f32.mrf.mxu0
        %v1064 = vadd.f32 %v599, %v1063
        %1065 = vmatmul.bf16.gmra.mxu0 %v908
        %v1066 = vpop.f32.mrf.mxu0
        %v1067 = vadd.f32 %v604, %v1066
        %v1068 = vpop.f32.mrf.mxu0
        %v1069 = vadd.f32 %v609, %v1068
        %1070 = vmatmul.bf16.gmra.mxu0 %v911
        %v1071 = vpop.f32.mrf.mxu0
        %v1072 = vadd.f32 %v614, %v1071
        %v1073 = vpop.f32.mrf.mxu0
        %v1074 = vadd.f32 %v619, %v1073
        %1075 = vmatmul.bf16.gmra.mxu0 %v914
        %v1076 = vpop.f32.mrf.mxu0
        %v1077 = vadd.f32 %v624, %v1076
        %v1078 = vpop.f32.mrf.mxu0
        %v1079 = vadd.f32 %v629, %v1078
        %1080 = vmatmul.bf16.gmra.mxu0 %v917
        %v1081 = vpop.f32.mrf.mxu0
        %v1082 = vadd.f32 %v634, %v1081
        %v1083 = vpop.f32.mrf.mxu0
        %v1084 = vadd.f32 %v639, %v1083
        %1085 = vmatmul.bf16.gmra.mxu0 %v920
        %v1086 = vpop.f32.mrf.mxu0
        %v1087 = vadd.f32 %v644, %v1086
        %v1088 = vpop.f32.mrf.mxu0
        %v1089 = vadd.f32 %v649, %v1088
        %1090 = vmatmul.bf16.gmra.mxu0 %v923
        %v1091 = vpop.f32.mrf.mxu0
        %v1092 = vadd.f32 %v654, %v1091
        %v1093 = vpop.f32.mrf.mxu0
        %v1094 = vadd.f32 %v659, %v1093
        %1095 = vmatmul.bf16.gmra.mxu0 %v926
        %v1096 = vpop.f32.mrf.mxu0
        %v1097 = vadd.f32 %v664, %v1096
        %v1098 = vpop.f32.mrf.mxu0
        %v1099 = vadd.f32 %v669, %v1098
        %1100 = vdwg.mxu0
        %v1101 = vmax.f32 %v942, 0.0
        %v1102 = vmax.f32 %v944, 0.0
        %v1103 = vmax.f32 %v947, 0.0
        %v1104 = vmax.f32 %v949, 0.0
        %v1105 = vmax.f32 %v952, 0.0
        %v1106 = vmax.f32 %v954, 0.0
        %v1107 = vmax.f32 %v957, 0.0
        %v1108 = vmax.f32 %v959, 0.0
        %v1109 = vmax.f32 %v962, 0.0
        %v1110 = vmax.f32 %v964, 0.0
        %v1111 = vmax.f32 %v967, 0.0
        %v1112 = vmax.f32 %v969, 0.0
        %v1113 = vmax.f32 %v972, 0.0
        %v1114 = vmax.f32 %v974, 0.0
        %v1115 = vmax.f32 %v977, 0.0
        %v1116 = vmax.f32 %v979, 0.0
        %v1117 = vmax.f32 %v982, 0.0
        %v1118 = vmax.f32 %v984, 0.0
        %v1119 = vmax.f32 %v987, 0.0
        %v1120 = vmax.f32 %v989, 0.0
        %v1121 = vmax.f32 %v992, 0.0
        %v1122 = vmax.f32 %v994, 0.0
        %v1123 = vmax.f32 %v997, 0.0
        %v1124 = vmax.f32 %v999, 0.0
        %v1125 = vmax.f32 %v1002, 0.0
        %v1126 = vmax.f32 %v1004, 0.0
        %v1127 = vmax.f32 %v1007, 0.0
        %v1128 = vmax.f32 %v1009, 0.0
        %v1129 = vmax.f32 %v1012, 0.0
        %v1130 = vmax.f32 %v1014, 0.0
        %v1131 = vmax.f32 %v1017, 0.0
        %v1132 = vmax.f32 %v1019, 0.0
        %v1133 = vmax.f32 %v1022, 0.0
        %v1134 = vmax.f32 %v1024, 0.0
        %v1135 = vmax.f32 %v1027, 0.0
        %v1136 = vmax.f32 %v1029, 0.0
        %v1137 = vmax.f32 %v1032, 0.0
        %v1138 = vmax.f32 %v1034, 0.0
        %v1139 = vmax.f32 %v1037, 0.0
        %v1140 = vmax.f32 %v1039, 0.0
        %v1141 = vmax.f32 %v1042, 0.0
        %v1142 = vmax.f32 %v1044, 0.0
        %v1143 = vmax.f32 %v1047, 0.0
        %v1144 = vmax.f32 %v1049, 0.0
        %v1145 = vmax.f32 %v1052, 0.0
        %v1146 = vmax.f32 %v1054, 0.0
        %v1147 = vmax.f32 %v1057, 0.0
        %v1148 = vmax.f32 %v1059, 0.0
        %v1149 = vmax.f32 %v1062, 0.0
        %v1150 = vmax.f32 %v1064, 0.0
        %v1151 = vmax.f32 %v1067, 0.0
        %v1152 = vmax.f32 %v1069, 0.0
        %v1153 = vmax.f32 %v1072, 0.0
        %v1154 = vmax.f32 %v1074, 0.0
        %v1155 = vmax.f32 %v1077, 0.0
        %v1156 = vmax.f32 %v1079, 0.0
        %v1157 = vmax.f32 %v1082, 0.0
        %v1158 = vmax.f32 %v1084, 0.0
        %v1159 = vmax.f32 %v1087, 0.0
        %v1160 = vmax.f32 %v1089, 0.0
        %v1161 = vmax.f32 %v1092, 0.0
        %v1162 = vmax.f32 %v1094, 0.0
        %v1163 = vmax.f32 %v1097, 0.0
        %v1164 = vmax.f32 %v1099, 0.0
        %v1165 = vld [vmem:[%s3] sm:$0xff]
        %v1166 = vld [vmem:[%s3 + $0x8] sm:$0xff]
        %v1167 = vpack.c.bf16 %v1102, %v1101
        %v1168 = vpack.c.bf16 %v1104, %v1103
        %v1169 = vpack.c.bf16 %v1106, %v1105
        %v1170 = vpack.c.bf16 %v1108, %v1107
        %v1171 = vpack.c.bf16 %v1110, %v1109
        %v1172 = vpack.c.bf16 %v1112, %v1111
        %v1173 = vpack.c.bf16 %v1114, %v1113
        %v1174 = vpack.c.bf16 %v1116, %v1115
        %v1175 = vpack.c.bf16 %v1118, %v1117
        %v1176 = vpack.c.bf16 %v1120, %v1119
        %v1177 = vpack.c.bf16 %v1122, %v1121
        %v1178 = vpack.c.bf16 %v1124, %v1123
        %v1179 = vpack.c.bf16 %v1126, %v1125
        %v1180 = vpack.c.bf16 %v1128, %v1127
        %v1181 = vpack.c.bf16 %v1130, %v1129
        %v1182 = vpack.c.bf16 %v1132, %v1131
        %v1183 = vpack.c.bf16 %v1134, %v1133
        %v1184 = vpack.c.bf16 %v1136, %v1135
        %v1185 = vpack.c.bf16 %v1138, %v1137
        %v1186 = vpack.c.bf16 %v1140, %v1139
        %v1187 = vpack.c.bf16 %v1142, %v1141
        %v1188 = vpack.c.bf16 %v1144, %v1143
        %v1189 = vpack.c.bf16 %v1146, %v1145
        %v1190 = vpack.c.bf16 %v1148, %v1147
        %v1191 = vpack.c.bf16 %v1150, %v1149
        %v1192 = vpack.c.bf16 %v1152, %v1151
        %v1193 = vpack.c.bf16 %v1154, %v1153
        %v1194 = vpack.c.bf16 %v1156, %v1155
        %v1195 = vpack.c.bf16 %v1158, %v1157
        %v1196 = vpack.c.bf16 %v1160, %v1159
        %v1197 = vpack.c.bf16 %v1162, %v1161
        %v1198 = vpack.c.bf16 %v1164, %v1163
        %v1199 = vld [vmem:[%s4] sm:$0xff]
        %1201 = vset.pattern.permute.xlu0 0
        %1202 = vperm.xlu0 %1201, %v1199
        %v1203 = vpop.permute.xlu0 %1202
        %v1207 = vunpack.c.l.b16 %v1165
        %v1208 = vunpack.c.h.b16 %v1165
        %v1209 = vunpack.c.l.b16 %v1166
        %v1210 = vunpack.c.h.b16 %v1166
        %v1211 = vpack.c.b16 %v1207, %v1207
        %v1212 = vpack.c.b16 %v1208, %v1208
        %v1213 = vpack.c.b16 %v1209, %v1209
        %v1214 = vpack.c.b16 %v1210, %v1210
        %1219 = vmatpush.bf16.msra.mxu0 %v1174
        %1220 = vmatpush.bf16.msra.mxu0 %v1173
        %1221 = vmatpush.bf16.msra.mxu0 %v1172
        %1222 = vmatpush.bf16.msra.mxu0 %v1171
        %1223 = vmatpush.bf16.msra.mxu0 %v1170
        %1224 = vmatpush.bf16.msra.mxu0 %v1169
        %1225 = vmatpush.bf16.msra.mxu0 %v1168
        %1226 = vmatpush.bf16.msra.mxu0 %v1167
        %1227 = vmatmul.bf16.gmra.mxu0 %v1211
        %v1228 = vpop.f32.mrf.mxu0
        %v1229 = vadd.f32 %v1203, %v1228
        %v1230 = vpop.f32.mrf.mxu0
        %1231 = vdwg.mxu0
        %1232 = vmatpush.bf16.msra.mxu0 %v1182
        %1233 = vmatpush.bf16.msra.mxu0 %v1181
        %1234 = vmatpush.bf16.msra.mxu0 %v1180
        %1235 = vmatpush.bf16.msra.mxu0 %v1179
        %1236 = vmatpush.bf16.msra.mxu0 %v1178
        %1237 = vmatpush.bf16.msra.mxu0 %v1177
        %1238 = vmatpush.bf16.msra.mxu0 %v1176
        %1239 = vmatpush.bf16.msra.mxu0 %v1175
        %1240 = vmatmul.bf16.gmra.mxu0 %v1212
        %v1241 = vpop.f32.mrf.mxu0
        %v1242 = vadd.f32 %v1229, %v1241
        %v1243 = vpop.f32.mrf.mxu0
        %1244 = vdwg.mxu0
        %1245 = vmatpush.bf16.msra.mxu0 %v1190
        %1246 = vmatpush.bf16.msra.mxu0 %v1189
        %1247 = vmatpush.bf16.msra.mxu0 %v1188
        %1248 = vmatpush.bf16.msra.mxu0 %v1187
        %1249 = vmatpush.bf16.msra.mxu0 %v1186
        %1250 = vmatpush.bf16.msra.mxu0 %v1185
        %1251 = vmatpush.bf16.msra.mxu0 %v1184
        %1252 = vmatpush.bf16.msra.mxu0 %v1183
        %1253 = vmatmul.bf16.gmra.mxu0 %v1213
        %v1254 = vpop.f32.mrf.mxu0
        %v1255 = vadd.f32 %v1242, %v1254
        %v1256 = vpop.f32.mrf.mxu0
        %1257 = vdwg.mxu0
        %1258 = vmatpush.bf16.msra.mxu0 %v1198
        %1259 = vmatpush.bf16.msra.mxu0 %v1197
        %1260 = vmatpush.bf16.msra.mxu0 %v1196
        %1261 = vmatpush.bf16.msra.mxu0 %v1195
        %1262 = vmatpush.bf16.msra.mxu0 %v1194
        %1263 = vmatpush.bf16.msra.mxu0 %v1193
        %1264 = vmatpush.bf16.msra.mxu0 %v1192
        %1265 = vmatpush.bf16.msra.mxu0 %v1191
        %1266 = vmatmul.bf16.gmra.mxu0 %v1214
        %v1267 = vpop.f32.mrf.mxu0
        %v1268 = vadd.f32 %v1255, %v1267
        %v1269 = vpop.f32.mrf.mxu0
        %1270 = vdwg.mxu0
        %v1272 = vrot.slane %v1268, 1
        %v1274 = vsub.f32 %v1268, %v1272
        %v1275 = vmul.f32 %v1274, 1.442695
        %v1276 = vpow.pop %v1275
        %v1277 = vadd.f32 %v1276, 1.0
        %v1278 = vrcp.pop %v1277
        %v1279 = vmul.f32 %v1277, %v1278
        %v1280 = vsub.f32 1.0, %v1279
        %v1281 = vmul.f32 %v1278, %v1280
        %v1282 = vadd.f32 %v1278, %v1281
        %vm1283 = vweird.f32 %v1277
        %vm1284 = vweird.f32 %v1278
        %vm1285 = vmor %vm1283, %vm1284
        %v1286 = vsel %vm1285, %v1278, %v1282
        %v1287 = vand.u32 2147483647, %v1277
        %vm1288 = vcmp.eq.f32.partialorder %v1287, 8.507059e+37
        %v1289 = vand.u32 %v1277, 2147483648
        %v1290 = vor.u32 1.1754944e-38, %v1289
        %v1291 = vsel %vm1288, %v1290, %v1286
        %v1292 = vmul.f32 1.0, %v1291
        %v1293 = vsub.f32 1.0, %v1292
        %v1294 = vlaneseq
        %v1295 = vshrl.u32 %v1294, 7
        %vm1296 = vcmp.eq.s32.totalorder %v1295, 0
        %vm1297 = vcmp.eq.s32.totalorder %v1295, 1
        %vm1298 = vcmp.eq.s32.totalorder %v1295, 2
        %vm1299 = vcmp.eq.s32.totalorder %v1295, 3
        %vm1300 = vcmp.eq.s32.totalorder %v1295, 4
        %v1301 = vperm.slane %v1268, 1
        %v1302 = vsel %vm1300, %v1301, 0.0
        %v1303 = vperm.slane %v1268, 0
        %v1304 = vsel %vm1299, %v1303, %v1302
        %v1305 = vperm.slane %v1268, 2
        %v1306 = vsel %vm1298, %v1305, %v1304
        %v1307 = vperm.slane %v1292, 0
        %v1308 = vsel %vm1297, %v1307, %v1306
        %v1309 = vperm.slane %v1293, 0
        %v1310 = vsel %vm1296, %v1309, %v1308
        %1311 = vst [vmem:[%s215] sm:$0xff] %v1310
        %s1312 = sand.u32 %s137, 1
        %s1313 = scalar_lea.sflag [#allocation3], %s1312
        %s1314 = sand.u32 %s137, 1
        %s1315 = smul.addr %s1314, 8
        %s1316 = scalar_lea.vmem [#allocation2], %s1315
        // Predicated region
        $region41: #{tpu_custom_call.1} parent=39 // pred_check
          %p1317 = pneg %p147
        $region42: #{tpu_custom_call.1} parent=39 // pred_check_branch
          %1319 = sbr.rel (%p1317) target = $region44
        $region43: #{tpu_custom_call.1} parent=39 // pred_region
          %1321 = vsyncadd %s1313, 0
          %s1322 = smul.addr %s19, 8
          %s1323 = scalar_lea.hbm %s5, %s1322
          %s1325 = sshll.u32 %s1316, 4
          %s1326 = int_to_ptr.vmem [resolvable:$true] %s1325
          %s1327 = sshll.u32 %s1323, 4
          %s1328 = int_to_ptr.hbm [resolvable:$true] %s1327
          %1330 = dma.vmem_to_hbm [thread:$0]  %s1326, 128, %s1328, %s1313
        $region44: #{tpu_custom_call.1} parent=39 // pred_fallthru
          _
      $region40: #{tpu_custom_call.1} parent=5 // pred_fallthru
        _
      %p1331 = scmp.le.s32.totalorder 2, %s14
      // Predicated region
      $region45: #{tpu_custom_call.1} parent=5 // pred_check
        %p1332 = pneg %p1331
      $region46: #{tpu_custom_call.1} parent=5 // pred_check_branch
        %1334 = sbr.rel (%p1332) target = $region48
      $region47: #{tpu_custom_call.1} parent=5 // pred_region
        %s1335 = ssub.s32 %s14, 2
        // Predicated region
        $region49: #{tpu_custom_call.1} parent=47 // pred_check
          %p1336 = pneg %p153
        $region50: #{tpu_custom_call.1} parent=47 // pred_check_branch
          %1338 = sbr.rel (%p1336) target = $region52
        $region51: #{tpu_custom_call.1} parent=47 // pred_region
          %s1339 = sand.u32 %s138, 1
          %s1340 = scalar_lea.sflag [#allocation3], %s1339
          %s1341 = sand.u32 %s138, 1
          %s1342 = smul.addr %s1341, 8
          %s1343 = scalar_lea.vmem [#allocation2], %s1342
          %1345 = dma.done %s1340, 128
        $region52: #{tpu_custom_call.1} parent=47 // pred_fallthru
          _
      $region48: #{tpu_custom_call.1} parent=5 // pred_fallthru
        _
    $region6: #{tpu_custom_call.1} parent=1 // loop_footer
      %s18 = sadd.s32 1, %s14
    $region7: #{tpu_custom_call.1} parent=1 // loop_footer_branch
      %13 = sbr.rel target = $region3
    $region8: #{tpu_custom_call.1} parent=1 // loop_exit
      _
    %1346 = vsyncpa [#allocation3], 1
    %s1347 = scalar_lea.sflag [#allocation3], 1
    %1348 = vsyncpa %s1347, 1

</llo_original>
